<compile_context>
chip_gen: v5e
topology: v5e:2x2
jax: 0.10.0
libtpu: 0.0.40
codegen_flags: <defaults>
</compile_context>

<pallas_src>
import numpy as np
import jax
import jax.numpy as jnp
from jax.experimental import pallas as pl
from jax.experimental.pallas import tpu as pltpu


# ----------------------------------------------------------------------------
# Layer-size arithmetic (mirrors Denoiser.__init__ exactly, incl. float diff)
# ----------------------------------------------------------------------------
def denoiser_layer_dims(n_features, n_layers, increasing):
    diff = n_features / n_layers  # float, truncated with int() like the torch code
    prev = n_features
    down, up = [], []
    for _ in range(n_layers // 2):
        cur = prev + diff if increasing else prev - diff
        down.append((int(prev), int(cur)))
        prev = cur
    if increasing:
        mid = (int(prev), int(n_features * 2))
        prev = n_features * 2
    else:
        mid = (int(prev), int(n_features // 2))
        prev = n_features // 2
    for _ in range(n_layers // 2):
        cur = prev - diff if increasing else prev + diff
        up.append((int(prev), int(cur)))
        prev = cur
    return down, mid, up


def build_denoiser_params(key, n_features, n_layers, residuals, increasing,
                          dtype=jnp.float32):
    if residuals and increasing:
        # The original torch module is dimensionally inconsistent in this
        # combination (residual widths don't match the up-block inputs).
        raise ValueError("residuals=True with increasing=True is not "
                         "dimensionally consistent in the original Denoiser.")
    down, mid, up = denoiser_layer_dims(n_features, n_layers, increasing)
    all_dims = down + [mid] + up
    weights, biases = [], []
    for fan_in, fan_out in all_dims:
        key, kw, kb = jax.random.split(key, 3)
        bound = 1.0 / np.sqrt(fan_in)  # PyTorch Linear default init range
        weights.append(jax.random.uniform(kw, (fan_in, fan_out), dtype, -bound, bound))
        biases.append(jax.random.uniform(kb, (1, fan_out), dtype, -bound, bound))
    return weights, biases, len(down), len(up)


# ----------------------------------------------------------------------------
# Lane-dense block-diagonal packing
# ----------------------------------------------------------------------------
def pack_params_lane_dense(weights, biases):
    """Pack per-layer (K_i, N_i) weights / (1, N_i) biases into two zero-padded
    slabs shaped for lane-dense execution:

      * g = smallest power of two >= max layer width (the per-row group width)
      * P = 128 // g rows of the original batch are folded into one 128-lane
        row (P = 1 and F = g when g > 128)
      * w_slab[l] is an (F, F) block-diagonal matrix with P copies of the
        zero-padded (g, g) layer-l weight; b_slab[l] tiles the bias P times.

    The row-major reshape (B, g) -> (B/P, P*g) then makes the fused chain a
    sequence of fully lane-dense (tile, 128) x (128, 128) matmuls that are
    exactly equivalent to the per-row g-wide Linear layers (zero padding
    propagates exact zeros through the whole chain)."""
    f_max = max(max(w.shape) for w in weights)
    g = 8
    while g < f_max:
        g *= 2
    if g <= 128:
        P = 128 // g
        F = 128
    else:
        P = 1
        F = g                       # already a power of two >= 256 -> multiple of 128
    L = len(weights)
    w_slab = np.zeros((L, F, F), np.float32)
    b_slab = np.zeros((L, 1, F), np.float32)
    for i, (w, b) in enumerate(zip(weights, biases)):
        k, n = w.shape
        wp = np.zeros((g, g), np.float32)
        wp[:k, :n] = np.asarray(w, np.float32)
        bp = np.zeros((g,), np.float32)
        bp[:n] = np.asarray(b, np.float32).reshape(-1)
        for p in range(P):
            w_slab[i, p * g:(p + 1) * g, p * g:(p + 1) * g] = wp
            b_slab[i, 0, p * g:(p + 1) * g] = bp
    return jnp.asarray(w_slab), jnp.asarray(b_slab), g, P, F


# ----------------------------------------------------------------------------
# Pallas kernel: fully fused Denoiser chain on one (tile_r, F) activation tile
# ----------------------------------------------------------------------------
def make_denoiser_kernel(n_down, n_up, residuals):
    def kernel(x_ref, w_ref, b_ref, o_ref):
        x = x_ref[...]                        # (tile_r, F) f32, lane-dense
        li = 0
        res = []

        # down block
        for _ in range(n_down):
            x = jnp.dot(x, w_ref[li], preferred_element_type=jnp.float32) + b_ref[li]
            if residuals:
                res.append(x)
            li += 1

        # mid block
        x = jnp.dot(x, w_ref[li], preferred_element_type=jnp.float32) + b_ref[li]
        li += 1

        # up block (residuals consumed in reverse order, like the torch code)
        res = res[::-1]
        for i in range(n_up):
            inp = x + res[i] if residuals else x
            x = jnp.dot(inp, w_ref[li], preferred_element_type=jnp.float32) + b_ref[li]
            li += 1

        o_ref[...] = x.astype(o_ref.dtype)

    return kernel


def denoiser_forward(x, w_slab, b_slab, g, P, n_down, n_up, residuals, out_dim,
                     tile_r=512, min_grid_steps=2):
    B, Fin = x.shape
    L, F, _ = w_slab.shape
    assert P * g == F

    # Pad features up to the group width g (zeros are inert through the chain).
    if Fin < g:
        x = jnp.pad(x, ((0, 0), (0, g - Fin)))

    # Pad batch to a multiple of P and fold P rows into one lane-dense row.
    Bp = ((B + P - 1) // P) * P
    if Bp != B:
        x = jnp.pad(x, ((0, Bp - B), (0, 0)))
    R = Bp // P
    xp = x.reshape(R, F)            # free row-major repack: P rows -> 128 lanes

    # Pick a fat row tile (fewer ~0.35us grid steps), but keep >= 2 steps when
    # possible so the "parallel" batch axis can shard across v7x's two TCs.
    tr = min(tile_r, R)
    tr = max(8, (tr // 8) * 8)
    if R // tr < min_grid_steps and R >= 2 * 8:
        tr = max(8, (R // min_grid_steps) // 8 * 8)
    Rp = ((R + tr - 1) // tr) * tr
    if Rp != R:
        xp = jnp.pad(xp, ((0, Rp - R), (0, 0)))
    grid = (Rp // tr,)

    # --- VMEM budget: computed from real residency, generation-aware ceiling ---
    w_bytes = int(w_slab.size) * 4
    b_bytes = int(L * 8 * F) * 4            # (1, F) rows pad to 8 sublanes in VMEM
    act_bytes = tr * F * 4
    param_bytes = w_bytes + b_bytes
    single_buffer_params = param_bytes > (4 << 20)   # only worth it for large F
    param_resident = param_bytes if single_buffer_params else 2 * param_bytes
    vmem_need = (
        2 * 2 * act_bytes                   # x + out blocks, double-buffered
        + param_resident                    # resident weight/bias slabs
        + (n_down + 3) * act_bytes          # live activations / residuals
    )
    try:
        phys_vmem = int(getattr(pltpu.get_tpu_info(), "vmem_capacity_bytes",
                                64 << 20))
    except Exception:
        phys_vmem = 64 << 20                # v7x is the smallest (64 MiB)
    vmem_limit = int(min(max(2 * vmem_need, 16 << 20), int(phys_vmem * 0.75)))

    def const_spec(shape):
        idx = lambda i: (0,) * len(shape)
        if single_buffer_params:
            # Resident slab with a constant index_map: no need to double-buffer.
            return pl.BlockSpec(shape, idx, pipeline_mode=pl.Buffered(1))
        return pl.BlockSpec(shape, idx)

    cost = pl.CostEstimate(
        flops=int(2 * Rp * L * F * F),
        transcendentals=0,
        bytes_accessed=int(2 * Rp * F * 4 + int(w_slab.size) * 4
                           + int(b_slab.size) * 4),
    )

    kernel = make_denoiser_kernel(n_down, n_up, residuals)
    out = pl.pallas_call(
        kernel,
        out_shape=jax.ShapeDtypeStruct((Rp, F), x.dtype),
        grid_spec=pltpu.PrefetchScalarGridSpec(
            num_scalar_prefetch=0,
            grid=grid,
            in_specs=[
                pl.BlockSpec((tr, F), lambda i: (i, 0)),   # activations
                const_spec((L, F, F)),                     # weights: VMEM-resident
                const_spec((L, 1, F)),                     # biases:  VMEM-resident
            ],
            out_specs=pl.BlockSpec((tr, F), lambda i: (i, 0)),
        ),
        compiler_params=pltpu.CompilerParams(
            dimension_semantics=("parallel",),  # shards batch tiles across v7x TCs
            vmem_limit_bytes=vmem_limit,
        ),
        cost_estimate=cost,
    )(xp, w_slab, b_slab)

    # Unfold the lane packing and drop batch/feature padding.
    out = out[:R].reshape(Bp, g)[:B, :out_dim]
    return out


# ----------------------------------------------------------------------------
# Pure-JAX reference (unpadded, for correctness check)
# ----------------------------------------------------------------------------
def denoiser_reference(x, weights, biases, n_down, n_up, residuals):
    li = 0
    res = []
    for _ in range(n_down):
        x = x @ weights[li] + biases[li]
        if residuals:
            res.append(x)
        li += 1
    x = x @ weights[li] + biases[li]
    li += 1
    res = res[::-1]
    for i in range(n_up):
        inp = x + res[i] if residuals else x
        x = inp @ weights[li] + biases[li]
        li += 1
    return x


if __name__ == "__main__":
    # Config consistent with Denoiser(n_features=32, n_layers=4,
    #                                  residuals=True, increasing=False)
    n_features = 32
    n_layers = 4
    residuals = True
    increasing = False
    batch = 1024          # small, but enough rows for a >=2-step batch grid

    key = jax.random.PRNGKey(0)
    key, kp, kx = jax.random.split(key, 3)
    weights, biases, n_down, n_up = build_denoiser_params(
        kp, n_features, n_layers, residuals, increasing)
    w_slab, b_slab, g, P, F = pack_params_lane_dense(weights, biases)
    out_dim = weights[-1].shape[1]

    x = jax.random.normal(kx, (batch, n_features), jnp.float32)

    out = denoiser_forward(x, w_slab, b_slab, g, P, n_down, n_up,
                           residuals, out_dim)
    out = jax.block_until_ready(out)

    ref = denoiser_reference(x, weights, biases, n_down, n_up, residuals)
    np.testing.assert_allclose(np.asarray(out), np.asarray(ref),
                               rtol=1e-5, atol=2e-5)

    print("KERNEL_OK")
</pallas_src>

<mosaic_0001>
module attributes {stable_mosaic.version = 11 : i64} {
  func.func @kernel(%arg0: i32, %arg1: memref<128x128xf32, #tpu.memory_space<vmem>>, %arg2: memref<5x128x128xf32, #tpu.memory_space<vmem>>, %arg3: memref<5x1x128xf32, #tpu.memory_space<vmem>>, %arg4: memref<128x128xf32, #tpu.memory_space<vmem>>) attributes {dimension_semantics = [#tpu.dimension_semantics<parallel>], iteration_bounds = array<i64: 2>, scalar_prefetch = 0 : i64, scratch_operands = 0 : i64, tpu.core_type = #tpu.core_type<tc>, window_params = [{transform_indices = @transform_0, window_bounds = array<i64: 128, 128>}, {pipeline_mode = #tpu.pipeline_mode<synchronous>, transform_indices = @transform_1, window_bounds = array<i64: 5, 128, 128>}, {pipeline_mode = #tpu.pipeline_mode<synchronous>, transform_indices = @transform_2, window_bounds = array<i64: 5, 1, 128>}, {transform_indices = @transform_3, window_bounds = array<i64: 128, 128>}]} {
    %c0 = arith.constant 0 : index
    %c0_0 = arith.constant 0 : index
    %0 = vector.load %arg1[%c0, %c0_0] : memref<128x128xf32, #tpu.memory_space<vmem>>, vector<128x128xf32>
    %c0_1 = arith.constant 0 : index
    %c0_2 = arith.constant 0 : index
    %c0_3 = arith.constant 0 : index
    %1 = vector.load %arg2[%c0_1, %c0_2, %c0_3] : memref<5x128x128xf32, #tpu.memory_space<vmem>>, vector<1x128x128xf32>
    %2 = vector.shape_cast %1 : vector<1x128x128xf32> to vector<128x128xf32>
    %cst = arith.constant dense<0.000000e+00> : vector<128x128xf32>
    %3 = tpu.matmul %0, %2, %cst {dimension_numbers = #tpu.dot_dimension_numbers<[1], [0], [0], [1], [0, 0, 1, 1], [], []>} : vector<128x128xf32>, vector<128x128xf32>, vector<128x128xf32> -> vector<128x128xf32>
    %c0_4 = arith.constant 0 : index
    %c0_5 = arith.constant 0 : index
    %c0_6 = arith.constant 0 : index
    %4 = vector.load %arg3[%c0_4, %c0_5, %c0_6] : memref<5x1x128xf32, #tpu.memory_space<vmem>>, vector<1x1x128xf32>
    %5 = vector.shape_cast %4 : vector<1x1x128xf32> to vector<1x128xf32>
    %6 = vector.broadcast %5 : vector<1x128xf32> to vector<128x128xf32>
    %7 = arith.addf %3, %6 : vector<128x128xf32>
    %c1 = arith.constant 1 : index
    %c0_7 = arith.constant 0 : index
    %c0_8 = arith.constant 0 : index
    %8 = vector.load %arg2[%c1, %c0_7, %c0_8] : memref<5x128x128xf32, #tpu.memory_space<vmem>>, vector<1x128x128xf32>
    %9 = vector.shape_cast %8 : vector<1x128x128xf32> to vector<128x128xf32>
    %cst_9 = arith.constant dense<0.000000e+00> : vector<128x128xf32>
    %10 = tpu.matmul %7, %9, %cst_9 {dimension_numbers = #tpu.dot_dimension_numbers<[1], [0], [0], [1], [0, 0, 1, 1], [], []>} : vector<128x128xf32>, vector<128x128xf32>, vector<128x128xf32> -> vector<128x128xf32>
    %c1_10 = arith.constant 1 : index
    %c0_11 = arith.constant 0 : index
    %c0_12 = arith.constant 0 : index
    %11 = vector.load %arg3[%c1_10, %c0_11, %c0_12] : memref<5x1x128xf32, #tpu.memory_space<vmem>>, vector<1x1x128xf32>
    %12 = vector.shape_cast %11 : vector<1x1x128xf32> to vector<1x128xf32>
    %13 = vector.broadcast %12 : vector<1x128xf32> to vector<128x128xf32>
    %14 = arith.addf %10, %13 : vector<128x128xf32>
    %c2 = arith.constant 2 : index
    %c0_13 = arith.constant 0 : index
    %c0_14 = arith.constant 0 : index
    %15 = vector.load %arg2[%c2, %c0_13, %c0_14] : memref<5x128x128xf32, #tpu.memory_space<vmem>>, vector<1x128x128xf32>
    %16 = vector.shape_cast %15 : vector<1x128x128xf32> to vector<128x128xf32>
    %cst_15 = arith.constant dense<0.000000e+00> : vector<128x128xf32>
    %17 = tpu.matmul %14, %16, %cst_15 {dimension_numbers = #tpu.dot_dimension_numbers<[1], [0], [0], [1], [0, 0, 1, 1], [], []>} : vector<128x128xf32>, vector<128x128xf32>, vector<128x128xf32> -> vector<128x128xf32>
    %c2_16 = arith.constant 2 : index
    %c0_17 = arith.constant 0 : index
    %c0_18 = arith.constant 0 : index
    %18 = vector.load %arg3[%c2_16, %c0_17, %c0_18] : memref<5x1x128xf32, #tpu.memory_space<vmem>>, vector<1x1x128xf32>
    %19 = vector.shape_cast %18 : vector<1x1x128xf32> to vector<1x128xf32>
    %20 = vector.broadcast %19 : vector<1x128xf32> to vector<128x128xf32>
    %21 = arith.addf %17, %20 : vector<128x128xf32>
    %22 = arith.addf %21, %14 : vector<128x128xf32>
    %c3 = arith.constant 3 : index
    %c0_19 = arith.constant 0 : index
    %c0_20 = arith.constant 0 : index
    %23 = vector.load %arg2[%c3, %c0_19, %c0_20] : memref<5x128x128xf32, #tpu.memory_space<vmem>>, vector<1x128x128xf32>
    %24 = vector.shape_cast %23 : vector<1x128x128xf32> to vector<128x128xf32>
    %cst_21 = arith.constant dense<0.000000e+00> : vector<128x128xf32>
    %25 = tpu.matmul %22, %24, %cst_21 {dimension_numbers = #tpu.dot_dimension_numbers<[1], [0], [0], [1], [0, 0, 1, 1], [], []>} : vector<128x128xf32>, vector<128x128xf32>, vector<128x128xf32> -> vector<128x128xf32>
    %c3_22 = arith.constant 3 : index
    %c0_23 = arith.constant 0 : index
    %c0_24 = arith.constant 0 : index
    %26 = vector.load %arg3[%c3_22, %c0_23, %c0_24] : memref<5x1x128xf32, #tpu.memory_space<vmem>>, vector<1x1x128xf32>
    %27 = vector.shape_cast %26 : vector<1x1x128xf32> to vector<1x128xf32>
    %28 = vector.broadcast %27 : vector<1x128xf32> to vector<128x128xf32>
    %29 = arith.addf %25, %28 : vector<128x128xf32>
    %30 = arith.addf %29, %7 : vector<128x128xf32>
    %c4 = arith.constant 4 : index
    %c0_25 = arith.constant 0 : index
    %c0_26 = arith.constant 0 : index
    %31 = vector.load %arg2[%c4, %c0_25, %c0_26] : memref<5x128x128xf32, #tpu.memory_space<vmem>>, vector<1x128x128xf32>
    %32 = vector.shape_cast %31 : vector<1x128x128xf32> to vector<128x128xf32>
    %cst_27 = arith.constant dense<0.000000e+00> : vector<128x128xf32>
    %33 = tpu.matmul %30, %32, %cst_27 {dimension_numbers = #tpu.dot_dimension_numbers<[1], [0], [0], [1], [0, 0, 1, 1], [], []>} : vector<128x128xf32>, vector<128x128xf32>, vector<128x128xf32> -> vector<128x128xf32>
    %c4_28 = arith.constant 4 : index
    %c0_29 = arith.constant 0 : index
    %c0_30 = arith.constant 0 : index
    %34 = vector.load %arg3[%c4_28, %c0_29, %c0_30] : memref<5x1x128xf32, #tpu.memory_space<vmem>>, vector<1x1x128xf32>
    %35 = vector.shape_cast %34 : vector<1x1x128xf32> to vector<1x128xf32>
    %36 = vector.broadcast %35 : vector<1x128xf32> to vector<128x128xf32>
    %37 = arith.addf %33, %36 : vector<128x128xf32>
    %c0_31 = arith.constant 0 : index
    %c0_32 = arith.constant 0 : index
    %38 = vector.load %arg4[%c0_31, %c0_32] : memref<128x128xf32, #tpu.memory_space<vmem>>, vector<128x128xf32>
    tpu.vector_store %arg4[%c0_31, %c0_32], %37 {strides = array<i32>} : memref<128x128xf32, #tpu.memory_space<vmem>>, vector<128x128xf32>,
    return
  }
  func.func @transform_0(%arg0: i32) -> (i32, i32) {
    %c0_i32 = arith.constant 0 : i32
    %c0_i32_0 = arith.constant 0 : i32
    return %arg0, %c0_i32 : i32, i32
  }
  func.func @transform_1(%arg0: i32) -> (i32, i32, i32) {
    %c0_i32 = arith.constant 0 : i32
    %c0_i32_0 = arith.constant 0 : i32
    %c0_i32_1 = arith.constant 0 : i32
    %c0_i32_2 = arith.constant 0 : i32
    return %c0_i32, %c0_i32_0, %c0_i32_1 : i32, i32, i32
  }
  func.func @transform_2(%arg0: i32) -> (i32, i32, i32) {
    %c0_i32 = arith.constant 0 : i32
    %c0_i32_0 = arith.constant 0 : i32
    %c0_i32_1 = arith.constant 0 : i32
    %c0_i32_2 = arith.constant 0 : i32
    return %c0_i32, %c0_i32_0, %c0_i32_1 : i32, i32, i32
  }
  func.func @transform_3(%arg0: i32) -> (i32, i32) {
    %c0_i32 = arith.constant 0 : i32
    %c0_i32_0 = arith.constant 0 : i32
    return %arg0, %c0_i32 : i32, i32
  }
}

</mosaic_0001>

<llo_original>
// kernel: tpu_custom_call.1
$region0: #{tpu_custom_call.1}
  #allocation0 [shape = 'u32[]', space=smem, size = 0x4, offset = 0x4, fixed_abs, tag = 'smem constant byte address 0x4 - core index']
  #allocation1 [shape = 'u32[72,128]{1,0:T(1,128)}', space=vmem, size = 0x9000, scoped, tag = 'internal scratch']
  %s0 = inlined_call_operand.hbm [shape: f32[256,128], index: 0, kind: input, shape index: {}]
  %s1 = inlined_call_operand.hbm [shape: f32[5,128,128], index: 1, kind: input, shape index: {}]
  %s2 = inlined_call_operand.hbm [shape: f32[5,1,128], index: 2, kind: input, shape index: {}]
  %s3 = inlined_call_operand.hbm [shape: f32[256,128], index: 3, kind: output, shape index: {}]
  %s4 = sld [smem:[#allocation0]]
  $region57: #{tpu_custom_call.1} parent=0
    _
  %s6 = ssub.s32 1, %s4
  %s7 = scalar_select 0, %s6, %s4
  $region1: #{tpu_custom_call.1} parent=0
    #allocation2 [shape = 'u8[131072]{0}', space=vmem, size = 0x20000, scoped, tag = 'input window, operand 0']
    #allocation3 [shape = 's32[2]{0}', space=sflag, size = 0x8, scoped, tag = 'scoped memory for tpu_custom_call.1']
    #allocation4 [shape = 's32[2]{0}', space=sflag, size = 0x8, scoped, tag = 'scoped memory for tpu_custom_call.1']
    #allocation5 [shape = 'u8[327680]{0}', space=vmem, size = 0x50000, scoped, tag = 'input window, operand 1, single buffered']
    #allocation6 [shape = 's32[1]{0}', space=sflag, size = 0x4, scoped, tag = 'scoped memory for tpu_custom_call.1']
    #allocation7 [shape = 'u8[2560]{0}', space=vmem, size = 0xc00, scoped, tag = 'input window, operand 2, single buffered']
    #allocation8 [shape = 'u8[131072]{0}', space=vmem, size = 0x20000, scoped, tag = 'output window, operand 0']
    %8 = vsyncpa [#allocation3], 0
    %s9 = scalar_lea.sflag [#allocation3], 1
    %10 = vsyncpa %s9, 0
    %11 = vsyncpa [#allocation6], 0
    %12 = vsyncpa [#allocation4], 0
    %s13 = scalar_lea.sflag [#allocation4], 1
    %14 = vsyncpa %s13, 0
    loop: start=0, step=1, limit=4
    $region2: #{tpu_custom_call.1} parent=1 // loop_pre_header
      _
    $region3: #{tpu_custom_call.1} parent=1 // loop_header
      %s16 = sphi 0, %s20
      %p17 = scmp.ge.s32.totalorder %s16, 4
      %s26 = sphi 0, %s28
      %s29 = sphi 0, %s26
      %s30 = sphi 0, %s29
      %s46 = sphi 0, %s30
      %s50 = sphi 0, %s50
      %s52 = sphi 0, %s50
      %s53 = sphi 0, %s52
      %s67 = sphi 0, %s53
      %s71 = sphi 0, %s71
      %s73 = sphi 0, %s71
      %s74 = sphi 0, %s73
      %s88 = sphi 0, %s74
      %s94 = sphi 0, %s96
      %s97 = sphi 0, %s94
      %s98 = sphi 0, %s97
      %s114 = sphi 0, %s98
    $region4: #{tpu_custom_call.1} parent=1 // loop_header_branch
      %19 = sbr.rel (%p17) target = $region8
    $region5: #{tpu_custom_call.1} parent=1 // loop_body
      %s21 = ssub.s32 %s16, 1
      %s22 = ssub.s32 %s16, 2
      %s23 = sadd.s32 %s16, 1
      %s24 = ssub.s32 %s16, %s23
      %p25 = scmp.eq.s32.totalorder %s24, 0
      %s27 = sadd.s32 %s26, 1
      %s28 = scalar_select %p25, %s26, %s27
      %p31 = pneg %p25
      %p32 = scmp.eq.s32.totalorder %s16, 1
      %p33 = por %p31, %p32
      %p34 = scmp.ne.s32.totalorder %s26, %s29
      %p35 = scmp.eq.s32.totalorder %s16, 0
      %p36 = por %p34, %p35
      %p37 = scmp.ne.s32.totalorder %s26, %s29
      %p38 = scmp.eq.s32.totalorder %s21, 1
      %p39 = por %p37, %p38
      %p40 = scmp.ne.s32.totalorder %s29, %s30
      %p41 = scmp.eq.s32.totalorder %s21, 0
      %p42 = por %p40, %p41
      %p43 = scmp.ne.s32.totalorder %s29, %s30
      %p44 = scmp.eq.s32.totalorder %s22, 1
      %p45 = por %p43, %p44
      %p47 = scmp.ne.s32.totalorder %s30, %s46
      %p48 = scmp.eq.s32.totalorder %s22, 0
      %p49 = por %p47, %p48
      %s51 = sadd.s32 %s50, 1
      %p54 = scmp.eq.s32.totalorder %s16, 1
      %p55 = scmp.ne.s32.totalorder %s50, %s52
      %p56 = scmp.eq.s32.totalorder %s16, 0
      %p57 = por %p55, %p56
      %p58 = scmp.ne.s32.totalorder %s50, %s52
      %p59 = scmp.eq.s32.totalorder %s21, 1
      %p60 = por %p58, %p59
      %p61 = scmp.ne.s32.totalorder %s52, %s53
      %p62 = scmp.eq.s32.totalorder %s21, 0
      %p63 = por %p61, %p62
      %p64 = scmp.ne.s32.totalorder %s52, %s53
      %p65 = scmp.eq.s32.totalorder %s22, 1
      %p66 = por %p64, %p65
      %p68 = scmp.ne.s32.totalorder %s53, %s67
      %p69 = scmp.eq.s32.totalorder %s22, 0
      %p70 = por %p68, %p69
      %s72 = sadd.s32 %s71, 1
      %p75 = scmp.eq.s32.totalorder %s16, 1
      %p76 = scmp.ne.s32.totalorder %s71, %s73
      %p77 = scmp.eq.s32.totalorder %s16, 0
      %p78 = por %p76, %p77
      %p79 = scmp.ne.s32.totalorder %s71, %s73
      %p80 = scmp.eq.s32.totalorder %s21, 1
      %p81 = por %p79, %p80
      %p82 = scmp.ne.s32.totalorder %s73, %s74
      %p83 = scmp.eq.s32.totalorder %s21, 0
      %p84 = por %p82, %p83
      %p85 = scmp.ne.s32.totalorder %s73, %s74
      %p86 = scmp.eq.s32.totalorder %s22, 1
      %p87 = por %p85, %p86
      %p89 = scmp.ne.s32.totalorder %s74, %s88
      %p90 = scmp.eq.s32.totalorder %s22, 0
      %p91 = por %p89, %p90
      %s92 = ssub.s32 %s16, %s23
      %p93 = scmp.eq.s32.totalorder %s92, 0
      %s95 = sadd.s32 %s94, 1
      %s96 = scalar_select %p93, %s94, %s95
      %p99 = pneg %p93
      %p100 = scmp.eq.s32.totalorder %s16, 1
      %p101 = por %p99, %p100
      %p102 = scmp.ne.s32.totalorder %s94, %s97
      %p103 = scmp.eq.s32.totalorder %s16, 0
      %p104 = por %p102, %p103
      %p105 = scmp.ne.s32.totalorder %s94, %s97
      %p106 = scmp.eq.s32.totalorder %s21, 1
      %p107 = por %p105, %p106
      %p108 = scmp.ne.s32.totalorder %s97, %s98
      %p109 = scmp.eq.s32.totalorder %s21, 0
      %p110 = por %p108, %p109
      %p111 = scmp.ne.s32.totalorder %s97, %s98
      %p112 = scmp.eq.s32.totalorder %s22, 1
      %p113 = por %p111, %p112
      %p115 = scmp.ne.s32.totalorder %s98, %s114
      %p116 = scmp.eq.s32.totalorder %s22, 0
      %p117 = por %p115, %p116
      %p118 = scmp.le.s32.totalorder 1, %s16
      %p119 = scmp.lt.s32.totalorder %s16, 3
      %p120 = pnand %p118, %p119
      %p121 = pneg %p120
      // Predicated region
      $region9: #{tpu_custom_call.1} parent=5 // pred_check
        _
      $region10: #{tpu_custom_call.1} parent=5 // pred_check_branch
        %123 = sbr.rel (%p120) target = $region12
      $region11: #{tpu_custom_call.1} parent=5 // pred_region
        %s124 = ssub.s32 %s16, 1
        // Predicated region
        $region13: #{tpu_custom_call.1} parent=11 // pred_check
          %p125 = pneg %p63
        $region14: #{tpu_custom_call.1} parent=11 // pred_check_branch
          %127 = sbr.rel (%p125) target = $region16
        $region15: #{tpu_custom_call.1} parent=11 // pred_region
          %129 = vsyncadd [#allocation6], 0
          %s130 = sshll.u32 %s1, 4
          %s131 = int_to_ptr.hbm [resolvable:$true] %s130
          %s132 = sshll.u32 [#allocation5], 4
          %s133 = int_to_ptr.vmem [resolvable:$true] %s132
          %138 = dma.hbm_to_vmem [thread:$0]  %s131, 10240, %s133, [#allocation6], 128, 128, 8
        $region16: #{tpu_custom_call.1} parent=11 // pred_fallthru
          _
        // Predicated region
        $region17: #{tpu_custom_call.1} parent=11 // pred_check
          %p139 = pneg %p84
        $region18: #{tpu_custom_call.1} parent=11 // pred_check_branch
          %141 = sbr.rel (%p139) target = $region20
        $region19: #{tpu_custom_call.1} parent=11 // pred_region
          %143 = vsyncadd [#allocation6], 0
          %s144 = sshll.u32 %s2, 4
          %s145 = int_to_ptr.hbm [resolvable:$true] %s144
          %s146 = sshll.u32 [#allocation7], 4
          %s147 = int_to_ptr.vmem [resolvable:$true] %s146
          %152 = dma.hbm_to_vmem [thread:$0]  %s145, 80, %s147, [#allocation6], 16, 16, 1
        $region20: #{tpu_custom_call.1} parent=11 // pred_fallthru
          _
      $region12: #{tpu_custom_call.1} parent=5 // pred_fallthru
        _
      %p153 = scmp.lt.s32.totalorder %s16, 2
      // Predicated region
      $region21: #{tpu_custom_call.1} parent=5 // pred_check
        %p154 = pneg %p153
      $region22: #{tpu_custom_call.1} parent=5 // pred_check_branch
        %156 = sbr.rel (%p154) target = $region24
      $region23: #{tpu_custom_call.1} parent=5 // pred_region
        // Predicated region
        $region25: #{tpu_custom_call.1} parent=23 // pred_check
          %p157 = pneg %p36
        $region26: #{tpu_custom_call.1} parent=23 // pred_check_branch
          %159 = sbr.rel (%p157) target = $region28
        $region27: #{tpu_custom_call.1} parent=23 // pred_region
          %s160 = sand.u32 %s26, 1
          %s161 = scalar_lea.sflag [#allocation3], %s160
          %s162 = sand.u32 %s26, 1
          %s163 = smul.addr %s162, 128
          %s164 = scalar_lea.vmem [#allocation2], %s163
          %s165 = smul.u32 16, %s16
          %167 = vsyncadd %s161, 0
          %s168 = smul.addr %s165, 8
          %s169 = scalar_lea.hbm %s0, %s168
          %s170 = sshll.u32 %s169, 4
          %s171 = int_to_ptr.hbm [resolvable:$true] %s170
          %s172 = sshll.u32 %s164, 4
          %s173 = int_to_ptr.vmem [resolvable:$true] %s172
          %178 = dma.hbm_to_vmem [thread:$0]  %s171, 2048, %s173, %s161, 128, 128, 8
        $region28: #{tpu_custom_call.1} parent=23 // pred_fallthru
          _
      $region24: #{tpu_custom_call.1} parent=5 // pred_fallthru
        _
      %p179 = scmp.le.s32.totalorder 1, %s16
      %p180 = scmp.lt.s32.totalorder %s16, 3
      %p181 = pnand %p179, %p180
      %p182 = pneg %p181
      // Predicated region
      $region29: #{tpu_custom_call.1} parent=5 // pred_check
        _
      $region30: #{tpu_custom_call.1} parent=5 // pred_check_branch
        %184 = sbr.rel (%p181) target = $region32
      $region31: #{tpu_custom_call.1} parent=5 // pred_region
        %s185 = ssub.s32 %s16, 1
        %s186 = sand.u32 %s29, 1
        %s187 = scalar_lea.sflag [#allocation3], %s186
        %s188 = sand.u32 %s29, 1
        %s189 = smul.addr %s188, 128
        %s190 = scalar_lea.vmem [#allocation2], %s189
        // Predicated region
        $region33: #{tpu_custom_call.1} parent=31 // pred_check
          %p191 = pneg %p42
        $region34: #{tpu_custom_call.1} parent=31 // pred_check_branch
          %193 = sbr.rel (%p191) target = $region36
        $region35: #{tpu_custom_call.1} parent=31 // pred_region
          %195 = dma.done %s187, 2048
        $region36: #{tpu_custom_call.1} parent=31 // pred_fallthru
          _
        // Predicated region
        $region37: #{tpu_custom_call.1} parent=31 // pred_check
          %p196 = pneg %p63
        $region38: #{tpu_custom_call.1} parent=31 // pred_check_branch
          %198 = sbr.rel (%p196) target = $region40
        $region39: #{tpu_custom_call.1} parent=31 // pred_region
          %200 = dma.done [#allocation6], 10240
        $region40: #{tpu_custom_call.1} parent=31 // pred_fallthru
          _
        // Predicated region
        $region41: #{tpu_custom_call.1} parent=31 // pred_check
          %p201 = pneg %p84
        $region42: #{tpu_custom_call.1} parent=31 // pred_check_branch
          %203 = sbr.rel (%p201) target = $region44
        $region43: #{tpu_custom_call.1} parent=31 // pred_region
          %205 = dma.done [#allocation6], 80
        $region44: #{tpu_custom_call.1} parent=31 // pred_fallthru
          _
        %s206 = sand.u32 %s29, 1
        %s207 = scalar_lea.sflag [#allocation3], %s206
        %s208 = sand.u32 %s29, 1
        %s209 = smul.addr %s208, 128
        %s210 = scalar_lea.vmem [#allocation2], %s209
        %p211 = pneg %p42
        %p212 = pneg %p39
        %p213 = pneg %p63
        %p214 = pneg %p60
        %p215 = pneg %p84
        %p216 = pneg %p81
        %p217 = pneg %p110
        %p218 = pneg %p107
        %s219 = sand.u32 %s97, 1
        %s220 = scalar_lea.sflag [#allocation4], %s219
        %s221 = sand.u32 %s97, 1
        %s222 = smul.addr %s221, 128
        %s223 = scalar_lea.vmem [#allocation8], %s222
        %s224 = smul.u32 16, %s21
        %s225 = smul.u32 16, %s21
        %v226 = vld [vmem:[%s190] sm:$0xff]
        %v227 = vld [vmem:[%s190 + $0x8] sm:$0xff]
        %v228 = vld [vmem:[%s190 + $0x10] sm:$0xff]
        %v229 = vld [vmem:[%s190 + $0x18] sm:$0xff]
        %v230 = vld [vmem:[%s190 + $0x20] sm:$0xff]
        %v231 = vld [vmem:[%s190 + $0x28] sm:$0xff]
        %v232 = vld [vmem:[%s190 + $0x30] sm:$0xff]
        %v233 = vld [vmem:[%s190 + $0x38] sm:$0xff]
        %v234 = vld [vmem:[%s190 + $0x40] sm:$0xff]
        %v235 = vld [vmem:[%s190 + $0x48] sm:$0xff]
        %v236 = vld [vmem:[%s190 + $0x50] sm:$0xff]
        %v237 = vld [vmem:[%s190 + $0x58] sm:$0xff]
        %v238 = vld [vmem:[%s190 + $0x60] sm:$0xff]
        %v239 = vld [vmem:[%s190 + $0x68] sm:$0xff]
        %v240 = vld [vmem:[%s190 + $0x70] sm:$0xff]
        %v241 = vld [vmem:[%s190 + $0x78] sm:$0xff]
        %v242 = vld [vmem:[#allocation5] sm:$0xff]
        %v243 = vld [vmem:[#allocation5 + $0x8] sm:$0xff]
        %v244 = vld [vmem:[#allocation5 + $0x10] sm:$0xff]
        %v245 = vld [vmem:[#allocation5 + $0x18] sm:$0xff]
        %v246 = vld [vmem:[#allocation5 + $0x20] sm:$0xff]
        %v247 = vld [vmem:[#allocation5 + $0x28] sm:$0xff]
        %v248 = vld [vmem:[#allocation5 + $0x30] sm:$0xff]
        %v249 = vld [vmem:[#allocation5 + $0x38] sm:$0xff]
        %v250 = vld [vmem:[#allocation5 + $0x40] sm:$0xff]
        %v251 = vld [vmem:[#allocation5 + $0x48] sm:$0xff]
        %v252 = vld [vmem:[#allocation5 + $0x50] sm:$0xff]
        %v253 = vld [vmem:[#allocation5 + $0x58] sm:$0xff]
        %v254 = vld [vmem:[#allocation5 + $0x60] sm:$0xff]
        %v255 = vld [vmem:[#allocation5 + $0x68] sm:$0xff]
        %v256 = vld [vmem:[#allocation5 + $0x70] sm:$0xff]
        %v257 = vld [vmem:[#allocation5 + $0x78] sm:$0xff]
        %v258 = vld [vmem:[#allocation7] sm:$0x1]
        %v260 = vperm.slane %v258, 0
        %262 = vmatpush.msra.mxu0 %v257
        %263 = vmatpush.msra.mxu0 %v256
        %264 = vmatpush.msra.mxu0 %v255
        %265 = vmatpush.msra.mxu0 %v254
        %266 = vmatpush.msra.mxu0 %v253
        %267 = vmatpush.msra.mxu0 %v252
        %268 = vmatpush.msra.mxu0 %v251
        %269 = vmatpush.msra.mxu0 %v250
        %270 = vmatpush.msra.mxu0 %v249
        %271 = vmatpush.msra.mxu0 %v248
        %272 = vmatpush.msra.mxu0 %v247
        %273 = vmatpush.msra.mxu0 %v246
        %274 = vmatpush.msra.mxu0 %v245
        %275 = vmatpush.msra.mxu0 %v244
        %276 = vmatpush.msra.mxu0 %v243
        %277 = vmatpush.msra.mxu0 %v242
        %278 = vmatmul.f32.gmra.mxu0 %v226
        %v279 = vpop.f32.mrf.mxu0
        %v280 = vadd.f32 %v260, %v279
        %281 = vmatmul.f32.gmra.mxu0 %v227
        %v282 = vpop.f32.mrf.mxu0
        %v283 = vadd.f32 %v260, %v282
        %284 = vmatmul.f32.gmra.mxu0 %v228
        %v285 = vpop.f32.mrf.mxu0
        %v286 = vadd.f32 %v260, %v285
        %287 = vmatmul.f32.gmra.mxu0 %v229
        %v288 = vpop.f32.mrf.mxu0
        %v289 = vadd.f32 %v260, %v288
        %290 = vmatmul.f32.gmra.mxu0 %v230
        %v291 = vpop.f32.mrf.mxu0
        %v292 = vadd.f32 %v260, %v291
        %293 = vmatmul.f32.gmra.mxu0 %v231
        %v294 = vpop.f32.mrf.mxu0
        %v295 = vadd.f32 %v260, %v294
        %296 = vmatmul.f32.gmra.mxu0 %v232
        %v297 = vpop.f32.mrf.mxu0
        %v298 = vadd.f32 %v260, %v297
        %299 = vmatmul.f32.gmra.mxu0 %v233
        %v300 = vpop.f32.mrf.mxu0
        %v301 = vadd.f32 %v260, %v300
        %302 = vmatmul.f32.gmra.mxu0 %v234
        %v303 = vpop.f32.mrf.mxu0
        %v304 = vadd.f32 %v260, %v303
        %305 = vmatmul.f32.gmra.mxu0 %v235
        %v306 = vpop.f32.mrf.mxu0
        %v307 = vadd.f32 %v260, %v306
        %308 = vmatmul.f32.gmra.mxu0 %v236
        %v309 = vpop.f32.mrf.mxu0
        %v310 = vadd.f32 %v260, %v309
        %311 = vmatmul.f32.gmra.mxu0 %v237
        %v312 = vpop.f32.mrf.mxu0
        %v313 = vadd.f32 %v260, %v312
        %314 = vmatmul.f32.gmra.mxu0 %v238
        %v315 = vpop.f32.mrf.mxu0
        %v316 = vadd.f32 %v260, %v315
        %317 = vmatmul.f32.gmra.mxu0 %v239
        %v318 = vpop.f32.mrf.mxu0
        %v319 = vadd.f32 %v260, %v318
        %320 = vmatmul.f32.gmra.mxu0 %v240
        %v321 = vpop.f32.mrf.mxu0
        %v322 = vadd.f32 %v260, %v321
        %323 = vmatmul.f32.gmra.mxu0 %v241
        %v324 = vpop.f32.mrf.mxu0
        %v325 = vadd.f32 %v260, %v324
        %326 = vdwg.mxu0
        %s327 = scalar_lea.vmem [#allocation5], 128
        %v328 = vld [vmem:[%s327] sm:$0xff]
        %v329 = vld [vmem:[%s327 + $0x8] sm:$0xff]
        %v330 = vld [vmem:[%s327 + $0x10] sm:$0xff]
        %v331 = vld [vmem:[%s327 + $0x18] sm:$0xff]
        %v332 = vld [vmem:[%s327 + $0x20] sm:$0xff]
        %v333 = vld [vmem:[%s327 + $0x28] sm:$0xff]
        %v334 = vld [vmem:[%s327 + $0x30] sm:$0xff]
        %v335 = vld [vmem:[%s327 + $0x38] sm:$0xff]
        %v336 = vld [vmem:[%s327 + $0x40] sm:$0xff]
        %v337 = vld [vmem:[%s327 + $0x48] sm:$0xff]
        %v338 = vld [vmem:[%s327 + $0x50] sm:$0xff]
        %v339 = vld [vmem:[%s327 + $0x58] sm:$0xff]
        %v340 = vld [vmem:[%s327 + $0x60] sm:$0xff]
        %v341 = vld [vmem:[%s327 + $0x68] sm:$0xff]
        %v342 = vld [vmem:[%s327 + $0x70] sm:$0xff]
        %v343 = vld [vmem:[%s327 + $0x78] sm:$0xff]
        %s344 = scalar_lea.vmem [#allocation7], 1
        %v345 = vld [vmem:[%s344] sm:$0x1]
        %v347 = vperm.slane %v345, 0
        %349 = vmatpush.msra.mxu0 %v343
        %350 = vmatpush.msra.mxu0 %v342
        %351 = vmatpush.msra.mxu0 %v341
        %352 = vmatpush.msra.mxu0 %v340
        %353 = vmatpush.msra.mxu0 %v339
        %354 = vmatpush.msra.mxu0 %v338
        %355 = vmatpush.msra.mxu0 %v337
        %356 = vmatpush.msra.mxu0 %v336
        %357 = vmatpush.msra.mxu0 %v335
        %358 = vmatpush.msra.mxu0 %v334
        %359 = vmatpush.msra.mxu0 %v333
        %360 = vmatpush.msra.mxu0 %v332
        %361 = vmatpush.msra.mxu0 %v331
        %362 = vmatpush.msra.mxu0 %v330
        %363 = vmatpush.msra.mxu0 %v329
        %364 = vmatpush.msra.mxu0 %v328
        %365 = vmatmul.f32.gmra.mxu0 %v280
        %v366 = vpop.f32.mrf.mxu0
        %v367 = vadd.f32 %v347, %v366
        %368 = vmatmul.f32.gmra.mxu0 %v283
        %v369 = vpop.f32.mrf.mxu0
        %v370 = vadd.f32 %v347, %v369
        %371 = vmatmul.f32.gmra.mxu0 %v286
        %v372 = vpop.f32.mrf.mxu0
        %v373 = vadd.f32 %v347, %v372
        %374 = vmatmul.f32.gmra.mxu0 %v289
        %v375 = vpop.f32.mrf.mxu0
        %v376 = vadd.f32 %v347, %v375
        %377 = vmatmul.f32.gmra.mxu0 %v292
        %v378 = vpop.f32.mrf.mxu0
        %v379 = vadd.f32 %v347, %v378
        %380 = vmatmul.f32.gmra.mxu0 %v295
        %v381 = vpop.f32.mrf.mxu0
        %v382 = vadd.f32 %v347, %v381
        %383 = vmatmul.f32.gmra.mxu0 %v298
        %v384 = vpop.f32.mrf.mxu0
        %v385 = vadd.f32 %v347, %v384
        %386 = vmatmul.f32.gmra.mxu0 %v301
        %v387 = vpop.f32.mrf.mxu0
        %v388 = vadd.f32 %v347, %v387
        %389 = vmatmul.f32.gmra.mxu0 %v304
        %v390 = vpop.f32.mrf.mxu0
        %v391 = vadd.f32 %v347, %v390
        %392 = vmatmul.f32.gmra.mxu0 %v307
        %v393 = vpop.f32.mrf.mxu0
        %v394 = vadd.f32 %v347, %v393
        %395 = vmatmul.f32.gmra.mxu0 %v310
        %v396 = vpop.f32.mrf.mxu0
        %v397 = vadd.f32 %v347, %v396
        %398 = vmatmul.f32.gmra.mxu0 %v313
        %v399 = vpop.f32.mrf.mxu0
        %v400 = vadd.f32 %v347, %v399
        %401 = vmatmul.f32.gmra.mxu0 %v316
        %v402 = vpop.f32.mrf.mxu0
        %v403 = vadd.f32 %v347, %v402
        %404 = vmatmul.f32.gmra.mxu0 %v319
        %v405 = vpop.f32.mrf.mxu0
        %v406 = vadd.f32 %v347, %v405
        %407 = vmatmul.f32.gmra.mxu0 %v322
        %v408 = vpop.f32.mrf.mxu0
        %v409 = vadd.f32 %v347, %v408
        %410 = vmatmul.f32.gmra.mxu0 %v325
        %v411 = vpop.f32.mrf.mxu0
        %v412 = vadd.f32 %v347, %v411
        %413 = vdwg.mxu0
        %s414 = scalar_lea.vmem [#allocation5], 256
        %v415 = vld [vmem:[%s414] sm:$0xff]
        %v416 = vld [vmem:[%s414 + $0x8] sm:$0xff]
        %v417 = vld [vmem:[%s414 + $0x10] sm:$0xff]
        %v418 = vld [vmem:[%s414 + $0x18] sm:$0xff]
        %v419 = vld [vmem:[%s414 + $0x20] sm:$0xff]
        %v420 = vld [vmem:[%s414 + $0x28] sm:$0xff]
        %v421 = vld [vmem:[%s414 + $0x30] sm:$0xff]
        %v422 = vld [vmem:[%s414 + $0x38] sm:$0xff]
        %v423 = vld [vmem:[%s414 + $0x40] sm:$0xff]
        %v424 = vld [vmem:[%s414 + $0x48] sm:$0xff]
        %v425 = vld [vmem:[%s414 + $0x50] sm:$0xff]
        %v426 = vld [vmem:[%s414 + $0x58] sm:$0xff]
        %v427 = vld [vmem:[%s414 + $0x60] sm:$0xff]
        %v428 = vld [vmem:[%s414 + $0x68] sm:$0xff]
        %v429 = vld [vmem:[%s414 + $0x70] sm:$0xff]
        %v430 = vld [vmem:[%s414 + $0x78] sm:$0xff]
        %s431 = scalar_lea.vmem [#allocation7], 2
        %v432 = vld [vmem:[%s431] sm:$0x1]
        %v434 = vperm.slane %v432, 0
        %436 = vmatpush.msra.mxu0 %v430
        %437 = vmatpush.msra.mxu0 %v429
        %438 = vmatpush.msra.mxu0 %v428
        %439 = vmatpush.msra.mxu0 %v427
        %440 = vmatpush.msra.mxu0 %v426
        %441 = vmatpush.msra.mxu0 %v425
        %442 = vmatpush.msra.mxu0 %v424
        %443 = vmatpush.msra.mxu0 %v423
        %444 = vmatpush.msra.mxu0 %v422
        %445 = vmatpush.msra.mxu0 %v421
        %446 = vmatpush.msra.mxu0 %v420
        %447 = vmatpush.msra.mxu0 %v419
        %448 = vmatpush.msra.mxu0 %v418
        %449 = vmatpush.msra.mxu0 %v417
        %450 = vmatpush.msra.mxu0 %v416
        %451 = vmatpush.msra.mxu0 %v415
        %452 = vmatmul.f32.gmra.mxu0 %v367
        %v453 = vpop.f32.mrf.mxu0
        %v454 = vadd.f32 %v434, %v453
        %455 = vmatmul.f32.gmra.mxu0 %v370
        %v456 = vpop.f32.mrf.mxu0
        %v457 = vadd.f32 %v434, %v456
        %458 = vmatmul.f32.gmra.mxu0 %v373
        %v459 = vpop.f32.mrf.mxu0
        %v460 = vadd.f32 %v434, %v459
        %461 = vmatmul.f32.gmra.mxu0 %v376
        %v462 = vpop.f32.mrf.mxu0
        %v463 = vadd.f32 %v434, %v462
        %464 = vmatmul.f32.gmra.mxu0 %v379
        %v465 = vpop.f32.mrf.mxu0
        %v466 = vadd.f32 %v434, %v465
        %467 = vmatmul.f32.gmra.mxu0 %v382
        %v468 = vpop.f32.mrf.mxu0
        %v469 = vadd.f32 %v434, %v468
        %470 = vmatmul.f32.gmra.mxu0 %v385
        %v471 = vpop.f32.mrf.mxu0
        %v472 = vadd.f32 %v434, %v471
        %473 = vmatmul.f32.gmra.mxu0 %v388
        %v474 = vpop.f32.mrf.mxu0
        %v475 = vadd.f32 %v434, %v474
        %476 = vmatmul.f32.gmra.mxu0 %v391
        %v477 = vpop.f32.mrf.mxu0
        %v478 = vadd.f32 %v434, %v477
        %479 = vmatmul.f32.gmra.mxu0 %v394
        %v480 = vpop.f32.mrf.mxu0
        %v481 = vadd.f32 %v434, %v480
        %482 = vmatmul.f32.gmra.mxu0 %v397
        %v483 = vpop.f32.mrf.mxu0
        %v484 = vadd.f32 %v434, %v483
        %485 = vmatmul.f32.gmra.mxu0 %v400
        %v486 = vpop.f32.mrf.mxu0
        %v487 = vadd.f32 %v434, %v486
        %488 = vmatmul.f32.gmra.mxu0 %v403
        %v489 = vpop.f32.mrf.mxu0
        %v490 = vadd.f32 %v434, %v489
        %491 = vmatmul.f32.gmra.mxu0 %v406
        %v492 = vpop.f32.mrf.mxu0
        %v493 = vadd.f32 %v434, %v492
        %494 = vmatmul.f32.gmra.mxu0 %v409
        %v495 = vpop.f32.mrf.mxu0
        %v496 = vadd.f32 %v434, %v495
        %497 = vmatmul.f32.gmra.mxu0 %v412
        %v498 = vpop.f32.mrf.mxu0
        %v499 = vadd.f32 %v434, %v498
        %500 = vdwg.mxu0
        %v501 = vadd.f32 %v454, %v367
        %v502 = vadd.f32 %v457, %v370
        %v503 = vadd.f32 %v460, %v373
        %v504 = vadd.f32 %v463, %v376
        %v505 = vadd.f32 %v466, %v379
        %v506 = vadd.f32 %v469, %v382
        %v507 = vadd.f32 %v472, %v385
        %v508 = vadd.f32 %v475, %v388
        %v509 = vadd.f32 %v478, %v391
        %v510 = vadd.f32 %v481, %v394
        %v511 = vadd.f32 %v484, %v397
        %v512 = vadd.f32 %v487, %v400
        %v513 = vadd.f32 %v490, %v403
        %v514 = vadd.f32 %v493, %v406
        %v515 = vadd.f32 %v496, %v409
        %v516 = vadd.f32 %v499, %v412
        %s517 = scalar_lea.vmem [#allocation5], 384
        %v518 = vld [vmem:[%s517] sm:$0xff]
        %v519 = vld [vmem:[%s517 + $0x8] sm:$0xff]
        %v520 = vld [vmem:[%s517 + $0x10] sm:$0xff]
        %v521 = vld [vmem:[%s517 + $0x18] sm:$0xff]
        %v522 = vld [vmem:[%s517 + $0x20] sm:$0xff]
        %v523 = vld [vmem:[%s517 + $0x28] sm:$0xff]
        %v524 = vld [vmem:[%s517 + $0x30] sm:$0xff]
        %v525 = vld [vmem:[%s517 + $0x38] sm:$0xff]
        %v526 = vld [vmem:[%s517 + $0x40] sm:$0xff]
        %v527 = vld [vmem:[%s517 + $0x48] sm:$0xff]
        %v528 = vld [vmem:[%s517 + $0x50] sm:$0xff]
        %v529 = vld [vmem:[%s517 + $0x58] sm:$0xff]
        %v530 = vld [vmem:[%s517 + $0x60] sm:$0xff]
        %v531 = vld [vmem:[%s517 + $0x68] sm:$0xff]
        %v532 = vld [vmem:[%s517 + $0x70] sm:$0xff]
        %v533 = vld [vmem:[%s517 + $0x78] sm:$0xff]
        %s534 = scalar_lea.vmem [#allocation7], 3
        %v535 = vld [vmem:[%s534] sm:$0x1]
        %v537 = vperm.slane %v535, 0
        %539 = vmatpush.msra.mxu0 %v533
        %540 = vmatpush.msra.mxu0 %v532
        %541 = vmatpush.msra.mxu0 %v531
        %542 = vmatpush.msra.mxu0 %v530
        %543 = vmatpush.msra.mxu0 %v529
        %544 = vmatpush.msra.mxu0 %v528
        %545 = vmatpush.msra.mxu0 %v527
        %546 = vmatpush.msra.mxu0 %v526
        %547 = vmatpush.msra.mxu0 %v525
        %548 = vmatpush.msra.mxu0 %v524
        %549 = vmatpush.msra.mxu0 %v523
        %550 = vmatpush.msra.mxu0 %v522
        %551 = vmatpush.msra.mxu0 %v521
        %552 = vmatpush.msra.mxu0 %v520
        %553 = vmatpush.msra.mxu0 %v519
        %554 = vmatpush.msra.mxu0 %v518
        %555 = vmatmul.f32.gmra.mxu0 %v501
        %v556 = vpop.f32.mrf.mxu0
        %v557 = vadd.f32 %v537, %v556
        %558 = vmatmul.f32.gmra.mxu0 %v502
        %v559 = vpop.f32.mrf.mxu0
        %v560 = vadd.f32 %v537, %v559
        %561 = vmatmul.f32.gmra.mxu0 %v503
        %v562 = vpop.f32.mrf.mxu0
        %v563 = vadd.f32 %v537, %v562
        %564 = vmatmul.f32.gmra.mxu0 %v504
        %v565 = vpop.f32.mrf.mxu0
        %v566 = vadd.f32 %v537, %v565
        %567 = vmatmul.f32.gmra.mxu0 %v505
        %v568 = vpop.f32.mrf.mxu0
        %v569 = vadd.f32 %v537, %v568
        %570 = vmatmul.f32.gmra.mxu0 %v506
        %v571 = vpop.f32.mrf.mxu0
        %v572 = vadd.f32 %v537, %v571
        %573 = vmatmul.f32.gmra.mxu0 %v507
        %v574 = vpop.f32.mrf.mxu0
        %v575 = vadd.f32 %v537, %v574
        %576 = vmatmul.f32.gmra.mxu0 %v508
        %v577 = vpop.f32.mrf.mxu0
        %v578 = vadd.f32 %v537, %v577
        %579 = vmatmul.f32.gmra.mxu0 %v509
        %v580 = vpop.f32.mrf.mxu0
        %v581 = vadd.f32 %v537, %v580
        %582 = vmatmul.f32.gmra.mxu0 %v510
        %v583 = vpop.f32.mrf.mxu0
        %v584 = vadd.f32 %v537, %v583
        %585 = vmatmul.f32.gmra.mxu0 %v511
        %v586 = vpop.f32.mrf.mxu0
        %v587 = vadd.f32 %v537, %v586
        %588 = vmatmul.f32.gmra.mxu0 %v512
        %v589 = vpop.f32.mrf.mxu0
        %v590 = vadd.f32 %v537, %v589
        %591 = vmatmul.f32.gmra.mxu0 %v513
        %v592 = vpop.f32.mrf.mxu0
        %v593 = vadd.f32 %v537, %v592
        %594 = vmatmul.f32.gmra.mxu0 %v514
        %v595 = vpop.f32.mrf.mxu0
        %v596 = vadd.f32 %v537, %v595
        %597 = vmatmul.f32.gmra.mxu0 %v515
        %v598 = vpop.f32.mrf.mxu0
        %v599 = vadd.f32 %v537, %v598
        %600 = vmatmul.f32.gmra.mxu0 %v516
        %v601 = vpop.f32.mrf.mxu0
        %v602 = vadd.f32 %v537, %v601
        %603 = vdwg.mxu0
        %v604 = vadd.f32 %v557, %v280
        %v605 = vadd.f32 %v560, %v283
        %v606 = vadd.f32 %v563, %v286
        %v607 = vadd.f32 %v566, %v289
        %v608 = vadd.f32 %v569, %v292
        %v609 = vadd.f32 %v572, %v295
        %v610 = vadd.f32 %v575, %v298
        %v611 = vadd.f32 %v578, %v301
        %v612 = vadd.f32 %v581, %v304
        %v613 = vadd.f32 %v584, %v307
        %v614 = vadd.f32 %v587, %v310
        %v615 = vadd.f32 %v590, %v313
        %v616 = vadd.f32 %v593, %v316
        %v617 = vadd.f32 %v596, %v319
        %v618 = vadd.f32 %v599, %v322
        %v619 = vadd.f32 %v602, %v325
        %s620 = scalar_lea.vmem [#allocation5], 512
        %v621 = vld [vmem:[%s620] sm:$0xff]
        %v622 = vld [vmem:[%s620 + $0x8] sm:$0xff]
        %v623 = vld [vmem:[%s620 + $0x10] sm:$0xff]
        %v624 = vld [vmem:[%s620 + $0x18] sm:$0xff]
        %v625 = vld [vmem:[%s620 + $0x20] sm:$0xff]
        %v626 = vld [vmem:[%s620 + $0x28] sm:$0xff]
        %v627 = vld [vmem:[%s620 + $0x30] sm:$0xff]
        %v628 = vld [vmem:[%s620 + $0x38] sm:$0xff]
        %v629 = vld [vmem:[%s620 + $0x40] sm:$0xff]
        %v630 = vld [vmem:[%s620 + $0x48] sm:$0xff]
        %v631 = vld [vmem:[%s620 + $0x50] sm:$0xff]
        %v632 = vld [vmem:[%s620 + $0x58] sm:$0xff]
        %v633 = vld [vmem:[%s620 + $0x60] sm:$0xff]
        %v634 = vld [vmem:[%s620 + $0x68] sm:$0xff]
        %v635 = vld [vmem:[%s620 + $0x70] sm:$0xff]
        %v636 = vld [vmem:[%s620 + $0x78] sm:$0xff]
        %s637 = scalar_lea.vmem [#allocation7], 4
        %v638 = vld [vmem:[%s637] sm:$0x1]
        %v640 = vperm.slane %v638, 0
        %642 = vmatpush.msra.mxu0 %v636
        %643 = vmatpush.msra.mxu0 %v635
        %644 = vmatpush.msra.mxu0 %v634
        %645 = vmatpush.msra.mxu0 %v633
        %646 = vmatpush.msra.mxu0 %v632
        %647 = vmatpush.msra.mxu0 %v631
        %648 = vmatpush.msra.mxu0 %v630
        %649 = vmatpush.msra.mxu0 %v629
        %650 = vmatpush.msra.mxu0 %v628
        %651 = vmatpush.msra.mxu0 %v627
        %652 = vmatpush.msra.mxu0 %v626
        %653 = vmatpush.msra.mxu0 %v625
        %654 = vmatpush.msra.mxu0 %v624
        %655 = vmatpush.msra.mxu0 %v623
        %656 = vmatpush.msra.mxu0 %v622
        %657 = vmatpush.msra.mxu0 %v621
        %658 = vmatmul.f32.gmra.mxu0 %v604
        %v659 = vpop.f32.mrf.mxu0
        %v660 = vadd.f32 %v640, %v659
        %661 = vmatmul.f32.gmra.mxu0 %v605
        %v662 = vpop.f32.mrf.mxu0
        %v663 = vadd.f32 %v640, %v662
        %664 = vmatmul.f32.gmra.mxu0 %v606
        %v665 = vpop.f32.mrf.mxu0
        %v666 = vadd.f32 %v640, %v665
        %667 = vmatmul.f32.gmra.mxu0 %v607
        %v668 = vpop.f32.mrf.mxu0
        %v669 = vadd.f32 %v640, %v668
        %670 = vmatmul.f32.gmra.mxu0 %v608
        %v671 = vpop.f32.mrf.mxu0
        %v672 = vadd.f32 %v640, %v671
        %673 = vmatmul.f32.gmra.mxu0 %v609
        %v674 = vpop.f32.mrf.mxu0
        %v675 = vadd.f32 %v640, %v674
        %676 = vmatmul.f32.gmra.mxu0 %v610
        %v677 = vpop.f32.mrf.mxu0
        %v678 = vadd.f32 %v640, %v677
        %679 = vmatmul.f32.gmra.mxu0 %v611
        %v680 = vpop.f32.mrf.mxu0
        %v681 = vadd.f32 %v640, %v680
        %682 = vmatmul.f32.gmra.mxu0 %v612
        %v683 = vpop.f32.mrf.mxu0
        %v684 = vadd.f32 %v640, %v683
        %685 = vmatmul.f32.gmra.mxu0 %v613
        %v686 = vpop.f32.mrf.mxu0
        %v687 = vadd.f32 %v640, %v686
        %688 = vmatmul.f32.gmra.mxu0 %v614
        %v689 = vpop.f32.mrf.mxu0
        %v690 = vadd.f32 %v640, %v689
        %691 = vmatmul.f32.gmra.mxu0 %v615
        %v692 = vpop.f32.mrf.mxu0
        %v693 = vadd.f32 %v640, %v692
        %694 = vmatmul.f32.gmra.mxu0 %v616
        %v695 = vpop.f32.mrf.mxu0
        %v696 = vadd.f32 %v640, %v695
        %697 = vmatmul.f32.gmra.mxu0 %v617
        %v698 = vpop.f32.mrf.mxu0
        %v699 = vadd.f32 %v640, %v698
        %700 = vmatmul.f32.gmra.mxu0 %v618
        %v701 = vpop.f32.mrf.mxu0
        %v702 = vadd.f32 %v640, %v701
        %703 = vmatmul.f32.gmra.mxu0 %v619
        %v704 = vpop.f32.mrf.mxu0
        %v705 = vadd.f32 %v640, %v704
        %706 = vdwg.mxu0
        %707 = vst [vmem:[%s223] sm:$0xff] %v660
        %708 = vst [vmem:[%s223 + $0x8] sm:$0xff] %v663
        %709 = vst [vmem:[%s223 + $0x10] sm:$0xff] %v666
        %710 = vst [vmem:[%s223 + $0x18] sm:$0xff] %v669
        %711 = vst [vmem:[%s223 + $0x20] sm:$0xff] %v672
        %712 = vst [vmem:[%s223 + $0x28] sm:$0xff] %v675
        %713 = vst [vmem:[%s223 + $0x30] sm:$0xff] %v678
        %714 = vst [vmem:[%s223 + $0x38] sm:$0xff] %v681
        %715 = vst [vmem:[%s223 + $0x40] sm:$0xff] %v684
        %716 = vst [vmem:[%s223 + $0x48] sm:$0xff] %v687
        %717 = vst [vmem:[%s223 + $0x50] sm:$0xff] %v690
        %718 = vst [vmem:[%s223 + $0x58] sm:$0xff] %v693
        %719 = vst [vmem:[%s223 + $0x60] sm:$0xff] %v696
        %720 = vst [vmem:[%s223 + $0x68] sm:$0xff] %v699
        %721 = vst [vmem:[%s223 + $0x70] sm:$0xff] %v702
        %722 = vst [vmem:[%s223 + $0x78] sm:$0xff] %v705
        %s723 = sand.u32 %s97, 1
        %s724 = scalar_lea.sflag [#allocation4], %s723
        %s725 = sand.u32 %s97, 1
        %s726 = smul.addr %s725, 128
        %s727 = scalar_lea.vmem [#allocation8], %s726
        // Predicated region
        $region45: #{tpu_custom_call.1} parent=31 // pred_check
          %p728 = pneg %p107
        $region46: #{tpu_custom_call.1} parent=31 // pred_check_branch
          %730 = sbr.rel (%p728) target = $region48
        $region47: #{tpu_custom_call.1} parent=31 // pred_region
          %s731 = smul.u32 16, %s21
          %733 = vsyncadd %s724, 0
          %s734 = smul.addr %s731, 8
          %s735 = scalar_lea.hbm %s3, %s734
          %s736 = sshll.u32 %s727, 4
          %s737 = int_to_ptr.vmem [resolvable:$true] %s736
          %s738 = sshll.u32 %s735, 4
          %s739 = int_to_ptr.hbm [resolvable:$true] %s738
          %744 = dma.vmem_to_hbm [thread:$0]  %s737, 2048, %s739, %s724, 128, 128, 8
        $region48: #{tpu_custom_call.1} parent=31 // pred_fallthru
          _
      $region32: #{tpu_custom_call.1} parent=5 // pred_fallthru
        _
      %p745 = scmp.le.s32.totalorder 2, %s16
      // Predicated region
      $region49: #{tpu_custom_call.1} parent=5 // pred_check
        %p746 = pneg %p745
      $region50: #{tpu_custom_call.1} parent=5 // pred_check_branch
        %748 = sbr.rel (%p746) target = $region52
      $region51: #{tpu_custom_call.1} parent=5 // pred_region
        %s749 = ssub.s32 %s16, 2
        // Predicated region
        $region53: #{tpu_custom_call.1} parent=51 // pred_check
          %p750 = pneg %p113
        $region54: #{tpu_custom_call.1} parent=51 // pred_check_branch
          %752 = sbr.rel (%p750) target = $region56
        $region55: #{tpu_custom_call.1} parent=51 // pred_region
          %s753 = sand.u32 %s98, 1
          %s754 = scalar_lea.sflag [#allocation4], %s753
          %s755 = sand.u32 %s98, 1
          %s756 = smul.addr %s755, 128
          %s757 = scalar_lea.vmem [#allocation8], %s756
          %759 = dma.done %s754, 2048
        $region56: #{tpu_custom_call.1} parent=51 // pred_fallthru
          _
      $region52: #{tpu_custom_call.1} parent=5 // pred_fallthru
        _
    $region6: #{tpu_custom_call.1} parent=1 // loop_footer
      %s20 = sadd.s32 1, %s16
    $region7: #{tpu_custom_call.1} parent=1 // loop_footer_branch
      %15 = sbr.rel target = $region3
    $region8: #{tpu_custom_call.1} parent=1 // loop_exit
      _
    %760 = vsyncpa [#allocation3], 1
    %s761 = scalar_lea.sflag [#allocation3], 1
    %762 = vsyncpa %s761, 1
    %763 = vsyncpa [#allocation6], 1
    %764 = vsyncpa [#allocation4], 1
    %s765 = scalar_lea.sflag [#allocation4], 1
    %766 = vsyncpa %s765, 1

</llo_original>
